<compile_context>
chip_gen: v7x
topology: tpu7x:2x2x1
jax: 0.10.0
libtpu: 0.0.40
codegen_flags: <defaults>
</compile_context>

<pallas_src>
import functools

import jax
import jax.numpy as jnp
from jax.experimental import pallas as pl
from jax.experimental.pallas import tpu as pltpu

_LANE = 128
_ACC_ROWS = 8                        # accumulator = one (8,128) f32 vreg
_GRANULE = _ACC_ROWS * _LANE         # 1024 elements: head alignment
_MAX_BLOCK_BYTES = 8 * 1024 * 1024   # per input, per pipeline buffer
_MIN_BLOCK_BYTES = 64 * 1024


# ---------------------------------------------------------------------------
# Generation-aware VMEM budget
# ---------------------------------------------------------------------------
@functools.lru_cache(maxsize=1)
def _vmem_budget_bytes():
    cap = 64 * 1024 * 1024            # conservative default: v7x has 64 MiB
    try:
        info = pltpu.get_tpu_info()
        cap = int(getattr(info, "vmem_capacity_bytes", cap)) or cap
    except Exception:
        pass
    # ~65% of physical VMEM for the double-buffered inputs; the rest is
    # headroom for compiler-internal scratch, accumulators and the SMEM out.
    return max(16 * 1024 * 1024, min(int(cap * 0.65), 100 * 1024 * 1024))


# ---------------------------------------------------------------------------
# Layout helper: aligned Pallas head + tiny plain-JAX tail (no jnp.pad copy)
# ---------------------------------------------------------------------------
def _split_head_tail(x):
    flat = jnp.ravel(x)
    n = flat.shape[0]
    n_head = (n // _GRANULE) * _GRANULE
    if n_head == n:
        return flat.reshape(-1, _LANE), None        # bitcast, no copy
    if n_head == 0:
        return None, flat
    # TODO(synk): the slice may still materialize one copy of the aligned head
    # for ragged inputs; fully copy-free would need a ragged 1-D BlockSpec.
    return flat[:n_head].reshape(-1, _LANE), flat[n_head:]


def _make_index_map(nb, spc):
    if nb == 1:
        return lambda c, i: (0, 0)
    last = nb - 1
    # Clamp: once the global step passes this reduction's block count the
    # block index stops changing, so the pipeline does not re-fetch; the
    # kernel gates accumulation on the step count.
    return lambda c, i: (jnp.minimum(c * spc + i, last), 0)


# ---------------------------------------------------------------------------
# One fused pallas_call computing several sum-of-squares reductions at once.
#   kinds:  "sqdiff" -> sum((a - b)^2)   (two inputs)
#           "sq"     -> sum(v^2)          (one input)
# Grid = (n_split, steps_per_split): axis 0 is `parallel` (sharded across
# TensorCores on v7x, sequential otherwise), axis 1 is the streaming axis.
# Output is (n_split, n_red) of already-scaled partials (wrapper sums axis 0).
# ---------------------------------------------------------------------------
@functools.lru_cache(maxsize=None)
def _build_fused_call(meta, n_split, spc, vmem_limit_bytes):
    # meta: tuple of (kind, rows, block_rows, n_blocks, n_arrays, scale)
    n_red = len(meta)
    total_steps = n_split * spc

    in_specs = []
    scratch = []
    for kind, rows, br, nb, narr, scale in meta:
        imap = _make_index_map(nb, spc)
        for _ in range(narr):
            in_specs.append(pl.BlockSpec((br, _LANE), imap))
        # One (8,128) f32 accumulator per reduction: never streams a full
        # block-sized accumulator through VMEM (saves a load+store per step).
        scratch.append(pltpu.VMEM((_ACC_ROWS, _LANE), jnp.float32))
    n_in = len(in_specs)

    def kernel(*refs):
        in_refs = refs[:n_in]
        out_ref = refs[n_in]
        accs = refs[n_in + 1:]
        c = pl.program_id(0)
        i = pl.program_id(1)
        step = c * spc + i

        def _init():
            for acc in accs:
                acc[...] = jnp.zeros_like(acc)
        if spc == 1:
            _init()
        else:
            pl.when(i == 0)(_init)         # reset at the start of each split

        pos = 0
        for k, (kind, rows, br, nb, narr, scale) in enumerate(meta):
            refs_k = in_refs[pos:pos + narr]
            pos += narr
            acc = accs[k]

            def _block_sq(kind=kind, refs_k=refs_k):
                if kind == "sqdiff":
                    d = (refs_k[0][...].astype(jnp.float32)
                         - refs_k[1][...].astype(jnp.float32))
                else:
                    d = refs_k[0][...].astype(jnp.float32)
                return d * d

            def _fold(d2, br=br):
                # (br,128) -> (8,128): layout-preserving reshape + vreg adds
                # (pure VALU; no cross-lane XLU work until finalize).
                if br == _ACC_ROWS:
                    return d2
                return jnp.sum(
                    d2.reshape(br // _ACC_ROWS, _ACC_ROWS, _LANE), axis=0)

            def _full(acc=acc, f=_block_sq, fold=_fold):
                acc[...] += fold(f())

            tail_rows = rows % br
            if tail_rows == 0:
                if nb == total_steps:
                    _full()                     # every step is a valid block
                else:
                    pl.when(step < nb)(_full)
            else:
                # Mask only the single partial last block; all other steps
                # take the unmasked fast path (no per-step iota/cmp/select).
                def _masked(acc=acc, f=_block_sq, fold=_fold,
                            br=br, tail_rows=tail_rows):
                    d2 = f()
                    rid = jax.lax.broadcasted_iota(jnp.int32, (br, _LANE), 0)
                    acc[...] += fold(jnp.where(rid < tail_rows, d2, 0.0))
                pl.when(step < nb - 1)(_full)
                pl.when(step == nb - 1)(_masked)

        def _finalize():
            # Single cross-lane reduce per reduction per split; the 1/size
            # (and lat_w) scale is folded in so the kernel emits final scaled
            # loss partials directly.
            for k, m in enumerate(meta):
                out_ref[0, k] = jnp.sum(accs[k][...]) * m[5]
        if spc == 1:
            _finalize()
        else:
            pl.when(i == spc - 1)(_finalize)

    call = pl.pallas_call(
        kernel,
        out_shape=jax.ShapeDtypeStruct((n_split, n_red), jnp.float32),
        grid_spec=pltpu.PrefetchScalarGridSpec(
            num_scalar_prefetch=0,
            grid=(n_split, spc),
            in_specs=in_specs,
            out_specs=pl.BlockSpec((1, n_red), lambda c, i: (c, 0),
                                   memory_space=pltpu.MemorySpace.SMEM),
            scratch_shapes=scratch,
        ),
        compiler_params=pltpu.CompilerParams(
            dimension_semantics=("parallel", "arbitrary"),
            vmem_limit_bytes=int(vmem_limit_bytes)),
    )
    return jax.jit(call)


def _fused_reductions(specs, max_block_bytes=None):
    """specs: list of (kind, arrays, scale).  Returns scaled scalar results."""
    if max_block_bytes is None:
        max_block_bytes = _MAX_BLOCK_BYTES

    heads, tails = [], []
    for kind, arrs, scale in specs:
        hs, ts = zip(*(_split_head_tail(a) for a in arrs))
        heads.append(list(hs) if hs[0] is not None else None)
        tails.append(list(ts) if ts[0] is not None else None)

    head_ids = [k for k, h in enumerate(heads) if h is not None]
    head_vals = {}
    if head_ids:
        n_inputs = sum(len(heads[k]) for k in head_ids)
        budget = _vmem_budget_bytes()
        per_buf = max(_MIN_BLOCK_BYTES,
                      min(max_block_bytes, budget // (2 * n_inputs)))
        meta, arrays, nbs = [], [], []
        vmem_need = 0
        for k in head_ids:
            kind, _, scale = specs[k]
            h_list = heads[k]
            rows = h_list[0].shape[0]
            itemsize = h_list[0].dtype.itemsize
            gran = 16 if itemsize < 4 else 8        # bf16 packs 16 sublanes
            br = max(gran, (per_buf // (_LANE * itemsize)) // gran * gran)
            br = min(br, rows)
            nb = -(-rows // br)
            meta.append((kind, rows, br, nb, len(h_list), float(scale)))
            arrays.extend(h_list)
            nbs.append(nb)
            vmem_need += len(h_list) * 2 * br * _LANE * itemsize
        max_nb = max(nbs)
        # 2-way split of the streaming axis: on v7x the `parallel` axis is
        # sharded across the two TensorCores (~2x for large inputs); on
        # 1-core chips it runs sequentially and costs at most one extra
        # clamped grid step, so it is safe to enable statically.
        n_split = 2 if max_nb >= 4 else 1
        spc = -(-max_nb // n_split)
        vmem_need += len(meta) * _ACC_ROWS * _LANE * 4
        vmem_limit = max(32 * 1024 * 1024, vmem_need + 16 * 1024 * 1024)
        out = _build_fused_call(tuple(meta), n_split, spc,
                                int(vmem_limit))(*arrays)
        partial = jnp.sum(out, axis=0)              # combine per-split rows
        for col, k in enumerate(head_ids):
            head_vals[k] = partial[col]

    results = []
    for k, (kind, arrs, scale) in enumerate(specs):
        val = head_vals.get(k)
        if tails[k] is not None:                    # <1024-element tail in JAX
            if kind == "sqdiff":
                d = (tails[k][0].astype(jnp.float32)
                     - tails[k][1].astype(jnp.float32))
            else:
                d = tails[k][0].astype(jnp.float32)
            t_val = jnp.sum(d * d) * jnp.float32(scale)
            val = t_val if val is None else val + t_val
        results.append(jnp.float32(0.0) if val is None else val)
    return results


# ---------------------------------------------------------------------------
# Loss functions (usable standalone; fusable by LossModule via .pallas_spec)
# ---------------------------------------------------------------------------
def mse_loss(pred, target):
    """Equivalent of F.mse_loss(pred, target) (reduction='mean')."""
    return _fused_reductions([("sqdiff", (pred, target), 1.0 / pred.size)])[0]


mse_loss.pallas_spec = lambda pred, target: (("sqdiff", (pred, target)),
                                             1.0 / pred.size)


def latent_l2(z):
    """Latent regularizer: mean(z**2)."""
    return _fused_reductions([("sq", (z,), 1.0 / z.size)])[0]


latent_l2.pallas_spec = lambda z: (("sq", (z,)), 1.0 / z.size)


# ---------------------------------------------------------------------------
# Loss_Module equivalent (control flow mirrors the PyTorch forward exactly;
# all Pallas-backed reductions are deferred into ONE fused pallas_call).
# ---------------------------------------------------------------------------
class LossModule:
    def __init__(self, loss_rec, loss_lat=(None, None), lat_w=(1, 1)):
        self.l_rec = loss_rec
        self.l_lat = list(loss_lat)
        self.lat_w = list(lat_w)

    def __call__(self, x, x_, z, mode='no_trans'):
        x = list(x)
        x_ = list(x_)
        z = list(z)
        specs = []                          # deferred fused Pallas reductions
        slot_of_spec = []                   # output slot of each deferred spec
        extra = [jnp.float32(0.0)] * 5      # non-fusable losses land here
        v = 0
        if mode == 'no_rot':
            x.insert(0, False)
            v += 2
        if mode == 'no_trans':
            x.append(False)
        for i, (xr, x_r, zr) in enumerate(zip(x, x_, z)):
            if mode == 'no_rot' and i == 0:
                continue
            v += 1
            if hasattr(self.l_rec, 'pallas_spec'):
                (kind, arrs), scale = self.l_rec.pallas_spec(x_r, xr)
                slot_of_spec.append(v)
                specs.append((kind, arrs, scale))
            else:
                extra[v] = extra[v] + self.l_rec(x_r, xr)
            if self.l_lat[i] is not None:
                v += 1
                llat = self.l_lat[i]
                if hasattr(llat, 'pallas_spec'):
                    (kind, arrs), scale = llat.pallas_spec(zr)
                    slot_of_spec.append(v)
                    specs.append((kind, arrs, scale * self.lat_w[i]))
                else:
                    extra[v] = extra[v] + llat(zr) * self.lat_w[i]
            if mode == 'no_trans' and i == 0:
                break
        vals = _fused_reductions(specs) if specs else []
        # The 5-slot assembly and l[0] += l.sum() stay as a handful of tiny
        # host-side jnp ops (the per-term scales are already in the kernel).
        l = list(extra)
        for slot, val in zip(slot_of_spec, vals):
            l[slot] = l[slot] + val
        total = l[0] + l[1] + l[2] + l[3] + l[4]
        l[0] = l[0] + total
        return jnp.stack(l)


# ---------------------------------------------------------------------------
if __name__ == "__main__":
    key = jax.random.PRNGKey(0)
    ks = jax.random.split(key, 10)

    B, C, H, W = 2, 4, 16, 16
    Z = 512   # B*Z = 1024 -> the latent reduction also takes the Pallas path
    x = [jax.random.normal(ks[0], (B, C, H, W), jnp.float32),
         jax.random.normal(ks[1], (B, C, H, W), jnp.float32)]
    x_ = [jax.random.normal(ks[2], (B, C, H, W), jnp.float32),
          jax.random.normal(ks[3], (B, C, H, W), jnp.float32)]
    z = [jax.random.normal(ks[4], (B, Z), jnp.float32),
         jax.random.normal(ks[5], (B, Z), jnp.float32)]

    loss_mod = LossModule(mse_loss, loss_lat=[latent_l2, None],
                          lat_w=[0.5, 1.0])
    out = jax.block_until_ready(loss_mod(x, x_, z, mode='no_trans'))

    # Pure-JAX reference for the default 'no_trans' path.
    rec0 = jnp.mean((x_[0] - x[0]) ** 2)
    lat0 = jnp.mean(z[0] ** 2) * 0.5
    ref = jnp.array([rec0 + lat0, rec0, lat0, 0.0, 0.0], jnp.float32)
    assert jnp.allclose(out, ref, atol=1e-5, rtol=1e-5), (out, ref)

    # 'no_rot' path (rec pairs x_[1] with x[0] after the list insert).
    out_nr = jax.block_until_ready(loss_mod(x, x_, z, mode='no_rot'))
    rec_nr = jnp.mean((x_[1] - x[0]) ** 2)
    ref_nr = jnp.array([rec_nr, 0.0, 0.0, rec_nr, 0.0], jnp.float32)
    assert jnp.allclose(out_nr, ref_nr, atol=1e-5, rtol=1e-5), (out_nr, ref_nr)

    # Standalone (single-reduction) paths.
    assert jnp.allclose(mse_loss(x_[0], x[0]), rec0, atol=1e-5, rtol=1e-5)
    assert jnp.allclose(latent_l2(z[0]), jnp.mean(z[0] ** 2),
                        atol=1e-5, rtol=1e-5)

    # Multi-block stress test: a small per-buffer cap forces many blocks, a
    # masked partial last block, a clamped step, differing per-reduction
    # block counts, and the 2-way parallel split.
    a = jax.random.normal(ks[6], (2, 4, 232, 128), jnp.float32)
    b = jax.random.normal(ks[7], (2, 4, 232, 128), jnp.float32)
    zz = jax.random.normal(ks[8], (2, 512), jnp.float32)
    got = _fused_reductions(
        [("sqdiff", (a, b), 1.0 / a.size), ("sq", (zz,), 1.0 / zz.size)],
        max_block_bytes=64 * 1024)
    got = jax.block_until_ready(jnp.stack(got))
    ref2 = jnp.stack([jnp.mean((a - b) ** 2), jnp.mean(zz ** 2)])
    assert jnp.allclose(got, ref2, atol=1e-5, rtol=1e-5), (got, ref2)

    # Ragged element count (not a multiple of 1024): Pallas head + JAX tail.
    v = jax.random.normal(ks[9], (1030,), jnp.float32)
    assert jnp.allclose(latent_l2(v), jnp.mean(v ** 2), atol=1e-5, rtol=1e-5)

    print("KERNEL_OK")
</pallas_src>

<mosaic_0001>
module attributes {stable_mosaic.version = 11 : i64} {
  func.func @kernel(%arg0: i32, %arg1: i32, %arg2: memref<16x128xf32, #tpu.memory_space<vmem>>, %arg3: memref<16x128xf32, #tpu.memory_space<vmem>>, %arg4: memref<8x128xf32, #tpu.memory_space<vmem>>, %arg5: memref<1x2xf32, #tpu.memory_space<smem>>, %arg6: memref<8x128xf32, #tpu.memory_space<vmem>>, %arg7: memref<8x128xf32, #tpu.memory_space<vmem>>) attributes {dimension_semantics = [#tpu.dimension_semantics<parallel>, #tpu.dimension_semantics<arbitrary>], iteration_bounds = array<i64: 1, 1>, scalar_prefetch = 0 : i64, scratch_operands = 2 : i64, tpu.core_type = #tpu.core_type<tc>, window_params = [{pipeline_mode = #tpu.pipeline_mode<synchronous>, transform_indices = @transform_0, window_bounds = array<i64: 16, 128>}, {pipeline_mode = #tpu.pipeline_mode<synchronous>, transform_indices = @transform_1, window_bounds = array<i64: 16, 128>}, {pipeline_mode = #tpu.pipeline_mode<synchronous>, transform_indices = @transform_2, window_bounds = array<i64: 8, 128>}, {transform_indices = @transform_3, window_bounds = array<i64: 1, 2>}]} {
    %cst = arith.constant 0.000000e+00 : f32
    %0 = vector.broadcast %cst : f32 to vector<8x128xf32>
    %c0 = arith.constant 0 : index
    %c0_0 = arith.constant 0 : index
    %1 = vector.load %arg6[%c0, %c0_0] : memref<8x128xf32, #tpu.memory_space<vmem>>, vector<8x128xf32>
    tpu.vector_store %arg6[%c0, %c0_0], %0 {strides = array<i32>} : memref<8x128xf32, #tpu.memory_space<vmem>>, vector<8x128xf32>,
    %cst_1 = arith.constant 0.000000e+00 : f32
    %2 = vector.broadcast %cst_1 : f32 to vector<8x128xf32>
    %c0_2 = arith.constant 0 : index
    %c0_3 = arith.constant 0 : index
    %3 = vector.load %arg7[%c0_2, %c0_3] : memref<8x128xf32, #tpu.memory_space<vmem>>, vector<8x128xf32>
    tpu.vector_store %arg7[%c0_2, %c0_3], %2 {strides = array<i32>} : memref<8x128xf32, #tpu.memory_space<vmem>>, vector<8x128xf32>,
    %c0_4 = arith.constant 0 : index
    %c0_5 = arith.constant 0 : index
    %4 = vector.load %arg6[%c0_4, %c0_5] : memref<8x128xf32, #tpu.memory_space<vmem>>, vector<8x128xf32>
    %c0_6 = arith.constant 0 : index
    %c0_7 = arith.constant 0 : index
    %5 = vector.load %arg2[%c0_6, %c0_7] : memref<16x128xf32, #tpu.memory_space<vmem>>, vector<16x128xf32>
    %c0_8 = arith.constant 0 : index
    %c0_9 = arith.constant 0 : index
    %6 = vector.load %arg3[%c0_8, %c0_9] : memref<16x128xf32, #tpu.memory_space<vmem>>, vector<16x128xf32>
    %7 = arith.subf %5, %6 : vector<16x128xf32>
    %8 = arith.mulf %7, %7 : vector<16x128xf32>
    %9 = vector.shape_cast %8 : vector<16x128xf32> to vector<2x8x128xf32>
    %cst_10 = arith.constant dense<0.000000e+00> : vector<8x128xf32>
    %10 = vector.multi_reduction <add>, %9, %cst_10 [0] : vector<2x8x128xf32> to vector<8x128xf32>
    %11 = arith.addf %4, %10 : vector<8x128xf32>
    %c0_11 = arith.constant 0 : index
    %c0_12 = arith.constant 0 : index
    %12 = vector.load %arg6[%c0_11, %c0_12] : memref<8x128xf32, #tpu.memory_space<vmem>>, vector<8x128xf32>
    tpu.vector_store %arg6[%c0_11, %c0_12], %11 {strides = array<i32>} : memref<8x128xf32, #tpu.memory_space<vmem>>, vector<8x128xf32>,
    %c0_13 = arith.constant 0 : index
    %c0_14 = arith.constant 0 : index
    %13 = vector.load %arg7[%c0_13, %c0_14] : memref<8x128xf32, #tpu.memory_space<vmem>>, vector<8x128xf32>
    %c0_15 = arith.constant 0 : index
    %c0_16 = arith.constant 0 : index
    %14 = vector.load %arg4[%c0_15, %c0_16] : memref<8x128xf32, #tpu.memory_space<vmem>>, vector<8x128xf32>
    %15 = arith.mulf %14, %14 : vector<8x128xf32>
    %16 = arith.addf %13, %15 : vector<8x128xf32>
    %c0_17 = arith.constant 0 : index
    %c0_18 = arith.constant 0 : index
    %17 = vector.load %arg7[%c0_17, %c0_18] : memref<8x128xf32, #tpu.memory_space<vmem>>, vector<8x128xf32>
    tpu.vector_store %arg7[%c0_17, %c0_18], %16 {strides = array<i32>} : memref<8x128xf32, #tpu.memory_space<vmem>>, vector<8x128xf32>,
    %c0_19 = arith.constant 0 : index
    %c0_20 = arith.constant 0 : index
    %18 = vector.load %arg6[%c0_19, %c0_20] : memref<8x128xf32, #tpu.memory_space<vmem>>, vector<8x128xf32>
    %19 = vector.shape_cast %18 : vector<8x128xf32> to vector<1x8x128xf32>
    %cst_21 = arith.constant dense<0.000000e+00> : vector<1xf32>
    %20 = vector.multi_reduction <add>, %19, %cst_21 [1, 2] : vector<1x8x128xf32> to vector<1xf32>
    %21 = vector.shape_cast %20 : vector<1xf32> to vector<1x1x1xf32>
    %22 = vector.extract %21[0, 0, 0] : f32 from vector<1x1x1xf32>
    %cst_22 = arith.constant 4.8828125E-4 : f32
    %23 = arith.mulf %22, %cst_22 : f32
    %c0_23 = arith.constant 0 : index
    %c0_24 = arith.constant 0 : index
    %24 = memref.load %arg5[%c0_23, %c0_24] : memref<1x2xf32, #tpu.memory_space<smem>>
    memref.store %23, %arg5[%c0_23, %c0_24] : memref<1x2xf32, #tpu.memory_space<smem>>
    %c0_25 = arith.constant 0 : index
    %c0_26 = arith.constant 0 : index
    %25 = vector.load %arg7[%c0_25, %c0_26] : memref<8x128xf32, #tpu.memory_space<vmem>>, vector<8x128xf32>
    %26 = vector.shape_cast %25 : vector<8x128xf32> to vector<1x8x128xf32>
    %cst_27 = arith.constant dense<0.000000e+00> : vector<1xf32>
    %27 = vector.multi_reduction <add>, %26, %cst_27 [1, 2] : vector<1x8x128xf32> to vector<1xf32>
    %28 = vector.shape_cast %27 : vector<1xf32> to vector<1x1x1xf32>
    %29 = vector.extract %28[0, 0, 0] : f32 from vector<1x1x1xf32>
    %cst_28 = arith.constant 4.8828125E-4 : f32
    %30 = arith.mulf %29, %cst_28 : f32
    %c0_29 = arith.constant 0 : index
    %c1 = arith.constant 1 : index
    %31 = memref.load %arg5[%c0_29, %c1] : memref<1x2xf32, #tpu.memory_space<smem>>
    memref.store %30, %arg5[%c0_29, %c1] : memref<1x2xf32, #tpu.memory_space<smem>>
    return
  }
  func.func @transform_0(%arg0: i32, %arg1: i32) -> (i32, i32) {
    %c0_i32 = arith.constant 0 : i32
    %c0_i32_0 = arith.constant 0 : i32
    %c0_i32_1 = arith.constant 0 : i32
    return %c0_i32, %c0_i32_0 : i32, i32
  }
  func.func @transform_1(%arg0: i32, %arg1: i32) -> (i32, i32) {
    %c0_i32 = arith.constant 0 : i32
    %c0_i32_0 = arith.constant 0 : i32
    %c0_i32_1 = arith.constant 0 : i32
    return %c0_i32, %c0_i32_0 : i32, i32
  }
  func.func @transform_2(%arg0: i32, %arg1: i32) -> (i32, i32) {
    %c0_i32 = arith.constant 0 : i32
    %c0_i32_0 = arith.constant 0 : i32
    %c0_i32_1 = arith.constant 0 : i32
    return %c0_i32, %c0_i32_0 : i32, i32
  }
  func.func @transform_3(%arg0: i32, %arg1: i32) -> (i32, i32) {
    %c0_i32 = arith.constant 0 : i32
    %c0_i32_0 = arith.constant 0 : i32
    return %arg0, %c0_i32 : i32, i32
  }
}

</mosaic_0001>

<llo_original>
// kernel: tpu_custom_call.1
$region0: #{tpu_custom_call.1}
  #allocation0 [shape = 'u32[]', space=smem, size = 0x4, offset = 0x4, fixed_abs, tag = 'smem constant byte address 0x4 - core index']
  #allocation1 [shape = 'u32[144,128]{1,0:T(1,128)}', space=vmem, size = 0x12000, scoped, tag = 'internal scratch']
  #allocation2 [shape = 'f32[8,128]{1,0:T(8,128)}', space=vmem, size = 0x1000, scoped, tag = 'scratch operand']
  #allocation3 [shape = 'f32[8,128]{1,0:T(8,128)}', space=vmem, size = 0x1000, scoped, tag = 'scratch operand']
  %s0 = inlined_call_operand.hbm [shape: f32[16,128], index: 0, kind: input, shape index: {}]
  %s1 = inlined_call_operand.hbm [shape: f32[16,128], index: 1, kind: input, shape index: {}]
  %s2 = inlined_call_operand.hbm [shape: f32[8,128], index: 2, kind: input, shape index: {}]
  %s3 = inlined_call_operand.hbm [shape: f32[1,2], index: 3, kind: output, shape index: {}]
  %s4 = sld [smem:[#allocation0]]
  $region34: #{tpu_custom_call.1} parent=0
    _
  %s6 = ssub.s32 1, %s4
  %s7 = scalar_select 0, %s6, %s4
  $region1: #{tpu_custom_call.1} parent=0
    #allocation4 [shape = 'u8[8192]{0}', space=vmem, size = 0x2000, scoped, tag = 'input window, operand 0, single buffered']
    #allocation5 [shape = 's32[1]{0}', space=sflag, size = 0x4, scoped, tag = 'scoped memory for tpu_custom_call.1']
    #allocation6 [shape = 's32[1]{0}', space=sflag, size = 0x4, scoped, tag = 'scoped memory for tpu_custom_call.1']
    #allocation7 [shape = 'u8[8192]{0}', space=vmem, size = 0x2000, scoped, tag = 'input window, operand 1, single buffered']
    #allocation8 [shape = 's32[1]{0}', space=sflag, size = 0x4, scoped, tag = 'scoped memory for tpu_custom_call.1']
    #allocation9 [shape = 'u8[4096]{0}', space=vmem, size = 0x1000, scoped, tag = 'input window, operand 2, single buffered']
    #allocation10 [shape = 'u8[512]{0}', space=smem, size = 0x200, scoped, tag = 'output window, operand 0, single buffered']
    %8 = vsyncpa [#allocation5], 0
    %9 = vsyncpa [#allocation8], 0
    %10 = vsyncpa [#allocation6], 0
    // Predicated region
    $region2: #{tpu_custom_call.1} parent=1 // pred_check
      _
    $region3: #{tpu_custom_call.1} parent=1 // pred_check_branch
      %12 = sbr.rel (0) target = $region5
    $region4: #{tpu_custom_call.1} parent=1 // pred_region
      %s14 = ssub.s32 256, 256
      %15 = vsyncadd [#allocation5], %s14
      %s16 = sshll.u32 [#allocation4], 4
      %s17 = int_to_ptr.vmem [resolvable:$true] %s16
      %22 = dma.hbm_to_vmem [thread:$0]  %s0, 256, %s17, [#allocation5], 128, 128, 8
    $region5: #{tpu_custom_call.1} parent=1 // pred_fallthru
      _
    // Predicated region
    $region6: #{tpu_custom_call.1} parent=1 // pred_check
      _
    $region7: #{tpu_custom_call.1} parent=1 // pred_check_branch
      %24 = sbr.rel (0) target = $region9
    $region8: #{tpu_custom_call.1} parent=1 // pred_region
      %s26 = ssub.s32 256, 256
      %27 = vsyncadd [#allocation8], %s26
      %s28 = sshll.u32 [#allocation7], 4
      %s29 = int_to_ptr.vmem [resolvable:$true] %s28
      %34 = dma.hbm_to_vmem [thread:$0]  %s1, 256, %s29, [#allocation8], 128, 128, 8
    $region9: #{tpu_custom_call.1} parent=1 // pred_fallthru
      _
    // Predicated region
    $region10: #{tpu_custom_call.1} parent=1 // pred_check
      _
    $region11: #{tpu_custom_call.1} parent=1 // pred_check_branch
      %36 = sbr.rel (0) target = $region13
    $region12: #{tpu_custom_call.1} parent=1 // pred_region
      %s38 = ssub.s32 128, 128
      %39 = vsyncadd [#allocation8], %s38
      %s41 = sshll.u32 [#allocation9], 4
      %s42 = int_to_ptr.vmem [resolvable:$true] %s41
      %44 = dma.hbm_to_vmem [thread:$0]  %s2, 128, %s42, [#allocation8]
    $region13: #{tpu_custom_call.1} parent=1 // pred_fallthru
      _
    // Predicated region
    $region14: #{tpu_custom_call.1} parent=1 // pred_check
      _
    $region15: #{tpu_custom_call.1} parent=1 // pred_check_branch
      %46 = sbr.rel (0) target = $region17
    $region16: #{tpu_custom_call.1} parent=1 // pred_region
      %47 = dma.done [#allocation5], 256
    $region17: #{tpu_custom_call.1} parent=1 // pred_fallthru
      _
    // Predicated region
    $region18: #{tpu_custom_call.1} parent=1 // pred_check
      _
    $region19: #{tpu_custom_call.1} parent=1 // pred_check_branch
      %49 = sbr.rel (0) target = $region21
    $region20: #{tpu_custom_call.1} parent=1 // pred_region
      %50 = dma.done [#allocation8], 256
    $region21: #{tpu_custom_call.1} parent=1 // pred_fallthru
      _
    // Predicated region
    $region22: #{tpu_custom_call.1} parent=1 // pred_check
      _
    $region23: #{tpu_custom_call.1} parent=1 // pred_check_branch
      %52 = sbr.rel (0) target = $region25
    $region24: #{tpu_custom_call.1} parent=1 // pred_region
      %53 = dma.done [#allocation8], 128
    $region25: #{tpu_custom_call.1} parent=1 // pred_fallthru
      _
    %54 = vst [vmem:[#allocation2] sm:$0xff] 0.0
    %55 = vst [vmem:[#allocation3] sm:$0xff] 0.0
    %v56 = vld [vmem:[#allocation2] sm:$0xff]
    %v57 = vld [vmem:[#allocation4] sm:$0xff]
    %v58 = vld [vmem:[#allocation4 + $0x8] sm:$0xff]
    %v59 = vld [vmem:[#allocation7] sm:$0xff]
    %v60 = vld [vmem:[#allocation7 + $0x8] sm:$0xff]
    %v61 = vsub.f32 %v57, %v59
    %v62 = vsub.f32 %v58, %v60
    %v63 = vmul.f32 %v61, %v61
    %v64 = vmul.f32 %v62, %v62
    %v65 = vadd.f32 %v63, %v64
    %v66 = vadd.f32 %v56, %v65
    %67 = vst [vmem:[#allocation2] sm:$0xff] %v66
    %v68 = vld [vmem:[#allocation3] sm:$0xff]
    %v69 = vld [vmem:[#allocation9] sm:$0xff]
    %v70 = vmul.f32 %v69, %v69
    %v71 = vadd.f32 %v68, %v70
    %72 = vst [vmem:[#allocation3] sm:$0xff] %v71
    %v73 = vld [vmem:[#allocation2] sm:$0xff]
    %74 = vadd.xlane.f32.xlu0 %v73
    %v75 = vpop.xlane.xlu0 %74
    %v76 = vrot.slane %v75, 4
    %v77 = vadd.f32 %v75, %v76
    %v78 = vrot.slane %v77, 2
    %v79 = vadd.f32 %v77, %v78
    %v80 = vrot.slane %v79, 1
    %v81 = vadd.f32 %v79, %v80
    %s82 = vtos %v81
    %s83 = smul.f32 %s82, 0.00048828125
    %s84 = scalar_lea.smem [#allocation10], 0
    %85 = sst [smem:[%s84]] %s83
    %v86 = vld [vmem:[#allocation3] sm:$0xff]
    %87 = vadd.xlane.f32.xlu0 %v86
    %v88 = vpop.xlane.xlu0 %87
    %v89 = vrot.slane %v88, 4
    %v90 = vadd.f32 %v88, %v89
    %v91 = vrot.slane %v90, 2
    %v92 = vadd.f32 %v90, %v91
    %v93 = vrot.slane %v92, 1
    %v94 = vadd.f32 %v92, %v93
    %s95 = vtos %v94
    %s96 = smul.f32 %s95, 0.00048828125
    %s97 = scalar_lea.smem [#allocation10], 1
    %98 = sst [smem:[%s97]] %s96
    // Predicated region
    $region26: #{tpu_custom_call.1} parent=1 // pred_check
      _
    $region27: #{tpu_custom_call.1} parent=1 // pred_check_branch
      %100 = sbr.rel (0) target = $region29
    $region28: #{tpu_custom_call.1} parent=1 // pred_region
      %s102 = ssub.s32 16, 16
      %103 = vsyncadd [#allocation6], %s102
      %106 = dma.smem_to_hbm [#allocation10], 16, %s3, [#allocation6]
    $region29: #{tpu_custom_call.1} parent=1 // pred_fallthru
      _
    // Predicated region
    $region30: #{tpu_custom_call.1} parent=1 // pred_check
      _
    $region31: #{tpu_custom_call.1} parent=1 // pred_check_branch
      %108 = sbr.rel (0) target = $region33
    $region32: #{tpu_custom_call.1} parent=1 // pred_region
      %109 = dma.done [#allocation6], 16
    $region33: #{tpu_custom_call.1} parent=1 // pred_fallthru
      _
    %110 = sfence
    %111 = vsyncpa [#allocation5], 1
    %112 = vsyncpa [#allocation8], 1
    %113 = vsyncpa [#allocation6], 1

</llo_original>
